<compile_context>
chip_gen: v6e
topology: v6e:2x2x1
jax: 0.10.0
libtpu: 0.0.40
codegen_flags: <defaults>
</compile_context>

<pallas_src>
import jax
import jax.numpy as jnp
from jax.experimental import pallas as pl
from jax.experimental.pallas import tpu as pltpu


def _mlp_kernel(k_ref, xy_ref, w_ref, o_ref):
    # k_ref : SMEM (1,)   f32 -- k (combined scale: sqrt(k)*sqrt(k), applied post-relu)
    # xy_ref: VMEM (B, in_dim+2) f32 -- [x | y] packed (one DMA)
    # w_ref : VMEM (w1_row0+num_dim, num_dim) f32 -- packed [w0^T ; pad ; w1^T(cols 0:2)]
    # o_ref : SMEM (1, 1) f32 -- scalar output
    B = xy_ref.shape[0]
    in_dim = xy_ref.shape[1] - 2
    num_dim = w_ref.shape[1]
    w1_row0 = w_ref.shape[0] - num_dim

    xy = xy_ref[...]                                   # (B, in_dim+2), one vreg-load
    w = w_ref[...]                                     # packed weight slab
    x = xy[:, 0:in_dim]                                # (B, 10)
    y = xy[:, in_dim:in_dim + 2]                       # (B, 2)
    w0t = w[0:in_dim, :]                               # (10, num_dim)
    w1t = w[w1_row0:w1_row0 + num_dim, 0:2]            # (num_dim, 2)

    # layer0 + relu (sqrt(k) scaling deferred past the relu; valid since sqrt(k) >= 0)
    h = jnp.maximum(
        jnp.dot(x, w0t, preferred_element_type=jnp.float32), 0.0)   # (B, num_dim)

    # layer1; apply the combined k scale only to the tiny (B,2) result
    logits = k_ref[0] * jnp.dot(h, w1t, preferred_element_type=jnp.float32)  # (B, 2)

    # 2-class softmax in sigmoid form (exact divide; no cross-lane max/sum reduces)
    l0 = logits[:, 0:1]                                # (B, 1)
    l1 = logits[:, 1:2]                                # (B, 1)
    p0 = 1.0 / (1.0 + jnp.exp(l1 - l0))                # (B, 1)
    p1 = 1.0 - p0                                      # (B, 1)

    # residual, per-row L2 norm, mean over batch
    d0 = p0 - y[:, 0:1]
    d1 = p1 - y[:, 1:2]
    row = jnp.sqrt(d0 * d0 + d1 * d1)                  # (B, 1)
    o_ref[0, 0] = jnp.sum(row) * (1.0 / B)


def mlp_forward(x, y, w0, w1, k):
    """Pallas equivalent of MLP.forward(x, y).

    x : (B, ...) flattened to (B, 10)
    y : (B, 2)
    w0: (num_dim, 10)  -- torch Linear(10, num_dim).weight layout
    w1: (2, num_dim)   -- torch Linear(num_dim, 2).weight layout
    k : python/JAX scalar (k >= 0)
    """
    B = x.shape[0]
    x2 = jnp.reshape(x, (B, -1)).astype(jnp.float32)          # flatten(1, -1)
    y2 = y.astype(jnp.float32)
    in_dim = x2.shape[1]                                       # 10
    num_dim = w0.shape[0]

    # Pack activations and targets into one VMEM operand: [x | y]  -> one DMA.
    xy = jnp.concatenate([x2, y2], axis=1)                     # (B, in_dim + 2)

    # Pack both weight matrices into one sublane-aligned slab -> one DMA.
    # Rows [0:in_dim] = w0^T; rows [w1_row0 : w1_row0+num_dim, 0:2] = w1^T.
    # (With static weights this slab would be built once and cached across calls.)
    w1_row0 = ((in_dim + 7) // 8) * 8                          # 16, sublane-aligned
    slab = jnp.zeros((w1_row0 + num_dim, num_dim), jnp.float32)
    slab = slab.at[0:in_dim, :].set(jnp.transpose(w0.astype(jnp.float32)))
    slab = slab.at[w1_row0:w1_row0 + num_dim, 0:2].set(
        jnp.transpose(w1.astype(jnp.float32)))

    # Combined scale: original forward applies sqrt(k) twice -> total factor k.
    # No sqrt anywhere (neither wrapper nor kernel).
    k_arr = jnp.asarray([k], dtype=jnp.float32)

    out = pl.pallas_call(
        _mlp_kernel,
        out_shape=jax.ShapeDtypeStruct((1, 1), jnp.float32),
        in_specs=[
            pl.BlockSpec(memory_space=pltpu.SMEM),   # k scalar
            pl.BlockSpec(memory_space=pltpu.VMEM),   # [x | y]
            pl.BlockSpec(memory_space=pltpu.VMEM),   # packed weight slab
        ],
        out_specs=pl.BlockSpec(memory_space=pltpu.SMEM),
    )(k_arr, xy, slab)
    return out[0, 0]


if __name__ == "__main__":
    num_dim = 32
    batch = 2
    in_dim = 10       # fixed by Linear(10, num_dim)
    num_classes = 2   # fixed by Linear(num_dim, 2)
    k = 2.0

    key = jax.random.PRNGKey(0)
    kx, ky, k0, k1 = jax.random.split(key, 4)

    x = jax.random.normal(kx, (batch, in_dim), dtype=jnp.float32)
    # y: probability-like target over the 2 classes
    y = jax.nn.softmax(jax.random.normal(ky, (batch, num_classes),
                                         dtype=jnp.float32), axis=1)
    # Weights in torch nn.Linear layout: (out_features, in_features)
    w0 = 0.3 * jax.random.normal(k0, (num_dim, in_dim), dtype=jnp.float32)
    w1 = 0.3 * jax.random.normal(k1, (num_classes, num_dim), dtype=jnp.float32)

    result = mlp_forward(x, y, w0, w1, k)
    result = jax.block_until_ready(result)

    # Reference in plain JAX (same math as the PyTorch forward, un-deferred form).
    sk = jnp.sqrt(jnp.float32(k))
    h = jnp.maximum(sk * (x @ w0.T), 0.0)
    logits = sk * (h @ w1.T)
    p = jax.nn.softmax(logits, axis=1)
    d = p - y
    ref = jnp.mean(jnp.sqrt(jnp.sum(d * d, axis=1)))

    assert jnp.allclose(result, ref, rtol=1e-5, atol=1e-5), (result, ref)

    # TODO(synk): BaseNNs utility methods (get_param/update/perturb/set_param)
    # and MLP.init_params (loads ./MLP_init_params.pt) are training/IO helpers,
    # not part of the forward pass, and are not translated.
    print("KERNEL_OK")
</pallas_src>

<mosaic_0001>
module attributes {stable_mosaic.version = 11 : i64} {
  func.func @_mlp_kernel(%arg0: memref<1xf32, #tpu.memory_space<smem>>, %arg1: memref<2x12xf32, #tpu.memory_space<vmem>>, %arg2: memref<48x32xf32, #tpu.memory_space<vmem>>, %arg3: memref<1x1xf32, #tpu.memory_space<smem>>) attributes {dimension_semantics = [], scalar_prefetch = 0 : i64, scratch_operands = 0 : i64, tpu.core_type = #tpu.core_type<tc>} {
    %c0 = arith.constant 0 : index
    %c0_0 = arith.constant 0 : index
    %0 = vector.load %arg1[%c0, %c0_0] : memref<2x12xf32, #tpu.memory_space<vmem>>, vector<2x12xf32>
    %c0_1 = arith.constant 0 : index
    %c0_2 = arith.constant 0 : index
    %1 = vector.load %arg2[%c0_1, %c0_2] : memref<48x32xf32, #tpu.memory_space<vmem>>, vector<48x32xf32>
    %2 = vector.extract_strided_slice %0 {offsets = [0, 0], sizes = [2, 10], strides = [1, 1]} : vector<2x12xf32> to vector<2x10xf32>
    %3 = vector.extract_strided_slice %0 {offsets = [0, 10], sizes = [2, 2], strides = [1, 1]} : vector<2x12xf32> to vector<2x2xf32>
    %4 = vector.extract_strided_slice %1 {offsets = [0, 0], sizes = [10, 32], strides = [1, 1]} : vector<48x32xf32> to vector<10x32xf32>
    %5 = vector.extract_strided_slice %1 {offsets = [16, 0], sizes = [32, 2], strides = [1, 1]} : vector<48x32xf32> to vector<32x2xf32>
    %cst = arith.constant dense<0.000000e+00> : vector<2x32xf32>
    %6 = tpu.matmul %2, %4, %cst {dimension_numbers = #tpu.dot_dimension_numbers<[1], [0], [0], [1], [0, 0, 1, 1], [], []>} : vector<2x10xf32>, vector<10x32xf32>, vector<2x32xf32> -> vector<2x32xf32>
    %cst_3 = arith.constant 0.000000e+00 : f32
    %7 = vector.broadcast %cst_3 : f32 to vector<2x32xf32>
    %8 = arith.maximumf %6, %7 : vector<2x32xf32>
    %c0_4 = arith.constant 0 : index
    %9 = memref.load %arg0[%c0_4] : memref<1xf32, #tpu.memory_space<smem>>
    %cst_5 = arith.constant dense<0.000000e+00> : vector<2x2xf32>
    %10 = tpu.matmul %8, %5, %cst_5 {dimension_numbers = #tpu.dot_dimension_numbers<[1], [0], [0], [1], [0, 0, 1, 1], [], []>} : vector<2x32xf32>, vector<32x2xf32>, vector<2x2xf32> -> vector<2x2xf32>
    %11 = vector.broadcast %9 : f32 to vector<2x2xf32>
    %12 = arith.mulf %11, %10 : vector<2x2xf32>
    %13 = vector.extract_strided_slice %12 {offsets = [0, 0], sizes = [2, 1], strides = [1, 1]} : vector<2x2xf32> to vector<2x1xf32>
    %14 = vector.extract_strided_slice %12 {offsets = [0, 1], sizes = [2, 1], strides = [1, 1]} : vector<2x2xf32> to vector<2x1xf32>
    %15 = arith.subf %14, %13 : vector<2x1xf32>
    %16 = math.exp %15 : vector<2x1xf32>
    %cst_6 = arith.constant 1.000000e+00 : f32
    %17 = vector.broadcast %cst_6 : f32 to vector<2x1xf32>
    %18 = arith.addf %17, %16 : vector<2x1xf32>
    %cst_7 = arith.constant 1.000000e+00 : f32
    %19 = vector.broadcast %cst_7 : f32 to vector<2x1xf32>
    %20 = arith.divf %19, %18 : vector<2x1xf32>
    %cst_8 = arith.constant 1.000000e+00 : f32
    %21 = vector.broadcast %cst_8 : f32 to vector<2x1xf32>
    %22 = arith.subf %21, %20 : vector<2x1xf32>
    %23 = vector.extract_strided_slice %3 {offsets = [0, 0], sizes = [2, 1], strides = [1, 1]} : vector<2x2xf32> to vector<2x1xf32>
    %24 = arith.subf %20, %23 : vector<2x1xf32>
    %25 = vector.extract_strided_slice %3 {offsets = [0, 1], sizes = [2, 1], strides = [1, 1]} : vector<2x2xf32> to vector<2x1xf32>
    %26 = arith.subf %22, %25 : vector<2x1xf32>
    %27 = arith.mulf %24, %24 : vector<2x1xf32>
    %28 = arith.mulf %26, %26 : vector<2x1xf32>
    %29 = arith.addf %27, %28 : vector<2x1xf32>
    %30 = math.sqrt %29 : vector<2x1xf32>
    %31 = vector.shape_cast %30 : vector<2x1xf32> to vector<1x2x1xf32>
    %cst_9 = arith.constant dense<0.000000e+00> : vector<1xf32>
    %32 = vector.multi_reduction <add>, %31, %cst_9 [1, 2] : vector<1x2x1xf32> to vector<1xf32>
    %33 = vector.shape_cast %32 : vector<1xf32> to vector<1x1x1xf32>
    %34 = vector.extract %33[0, 0, 0] : f32 from vector<1x1x1xf32>
    %cst_10 = arith.constant 5.000000e-01 : f32
    %35 = arith.mulf %34, %cst_10 : f32
    %c0_11 = arith.constant 0 : index
    %c0_12 = arith.constant 0 : index
    %36 = memref.load %arg3[%c0_11, %c0_12] : memref<1x1xf32, #tpu.memory_space<smem>>
    memref.store %35, %arg3[%c0_11, %c0_12] : memref<1x1xf32, #tpu.memory_space<smem>>
    return
  }
}

</mosaic_0001>

<llo_original>
// kernel: tpu_custom_call.1
$region0: #{tpu_custom_call.1}
  #allocation0 [shape = 'u32[]', space=smem, size = 0x4, offset = 0x4, fixed_abs, tag = 'smem constant byte address 0x4 - core index']
  #allocation1 [shape = 'u32[144,128]{1,0:T(1,128)}', space=vmem, size = 0x12000, scoped, tag = 'internal scratch']
  #allocation2 [shape = 'f32[1]{0:T(128)S(6)}', space=smem, size = 0x200, scoped, tag = 'scoped memory for tpu_custom_call.1']
  %s0 = inlined_call_operand.<no memory space> [shape: f32[1], index: 0, kind: input, shape index: {}]
  %s1 = inlined_call_operand.vmem [shape: f32[2,12], index: 1, kind: input, shape index: {}]
  %s2 = inlined_call_operand.vmem [shape: f32[48,32], index: 2, kind: input, shape index: {}]
  %s3 = inlined_call_operand.hbm [shape: f32[1,1], index: 3, kind: output, shape index: {}]
  %s4 = sld [smem:[#allocation0]]
  $region22: #{tpu_custom_call.1} parent=0
    _
  %s6 = ssub.s32 1, %s4
  %s7 = scalar_select 0, %s6, %s4
  %8 = sst [smem:[#allocation2]] %s0
  $region1: #{tpu_custom_call.1} parent=0
    #allocation3 [shape = 'u8[512]{0}', space=smem, size = 0x200, scoped, tag = 'output window, operand 0, single buffered']
    #allocation4 [shape = 's32[1]{0}', space=sflag, size = 0x4, scoped, tag = 'scoped memory for tpu_custom_call.1']
    %9 = vsyncpa [#allocation4], 0
    // Predicated region
    $region2: #{tpu_custom_call.1} parent=1 // pred_check
      _
    $region3: #{tpu_custom_call.1} parent=1 // pred_check_branch
      %11 = sbr.rel (0) target = $region5
    $region4: #{tpu_custom_call.1} parent=1 // pred_region
      _
    $region5: #{tpu_custom_call.1} parent=1 // pred_fallthru
      _
    // Predicated region
    $region6: #{tpu_custom_call.1} parent=1 // pred_check
      _
    $region7: #{tpu_custom_call.1} parent=1 // pred_check_branch
      %13 = sbr.rel (0) target = $region9
    $region8: #{tpu_custom_call.1} parent=1 // pred_region
      _
    $region9: #{tpu_custom_call.1} parent=1 // pred_fallthru
      _
    // Predicated region
    $region10: #{tpu_custom_call.1} parent=1 // pred_check
      _
    $region11: #{tpu_custom_call.1} parent=1 // pred_check_branch
      %15 = sbr.rel (0) target = $region13
    $region12: #{tpu_custom_call.1} parent=1 // pred_region
      _
    $region13: #{tpu_custom_call.1} parent=1 // pred_fallthru
      _
    %v16 = vld [vmem:[%s1] sm:$0x3]
    %v17 = vld [vmem:[%s2] sm:$0xff]
    %v18 = vld [vmem:[%s2 + $0x8] sm:$0xff]
    %v19 = vld [vmem:[%s2 + $0x10] sm:$0xff]
    %v20 = vld [vmem:[%s2 + $0x18] sm:$0xff]
    %v21 = vld [vmem:[%s2 + $0x20] sm:$0xff]
    %v22 = vld [vmem:[%s2 + $0x28] sm:$0xff]
    %vm23 = vcmask 80896
    %v25 = vsel %vm23, %v16, 0
    %vm27 = vcmask 1041408
    %v29 = vsel %vm27, %v18, 0
    %31 = vmatprep.subr.mxu0 0.0
    %32 = vmatpush1.msra.mxu0 0.0
    %33 = vmatprep.subr.mxu0 0.0
    %34 = vmatpush1.msra.mxu0 0.0
    %35 = vmatprep.subr.mxu0 0.0
    %36 = vmatpush1.msra.mxu0 0.0
    %37 = vmatprep.subr.mxu0 0.0
    %38 = vmatpush1.msra.mxu0 0.0
    %39 = vmatprep.subr.mxu0 0.0
    %40 = vmatpush1.msra.mxu0 0.0
    %41 = vmatprep.subr.mxu0 0.0
    %42 = vmatpush1.msra.mxu0 0.0
    %43 = vmatprep.subr.mxu0 0.0
    %44 = vmatpush1.msra.mxu0 0.0
    %45 = vmatprep.subr.mxu0 0.0
    %46 = vmatpush1.msra.mxu0 0.0
    %47 = vmatprep.subr.mxu0 0.0
    %48 = vmatpush1.msra.mxu0 0.0
    %49 = vmatprep.subr.mxu0 0.0
    %50 = vmatpush1.msra.mxu0 0.0
    %51 = vmatprep.subr.mxu0 0.0
    %52 = vmatpush1.msra.mxu0 0.0
    %53 = vmatprep.subr.mxu0 0.0
    %54 = vmatpush1.msra.mxu0 0.0
    %55 = vmatprep.subr.mxu0 0.0
    %56 = vmatpush1.msra.mxu0 0.0
    %57 = vmatprep.subr.mxu0 0.0
    %58 = vmatpush1.msra.mxu0 0.0
    %59 = vmatprep.subr.mxu0 0.0
    %60 = vmatpush1.msra.mxu0 %v29
    %61 = vmatprep.subr.mxu0 0.0
    %62 = vmatpush1.msra.mxu0 %v17
    %63 = vmatprep.subr.mxu0 0.0
    %64 = vmatpush2.msra.mxu0 0.0
    %65 = vmatprep.subr.mxu0 0.0
    %66 = vmatpush2.msra.mxu0 0.0
    %67 = vmatprep.subr.mxu0 0.0
    %68 = vmatpush2.msra.mxu0 0.0
    %69 = vmatprep.subr.mxu0 0.0
    %70 = vmatpush2.msra.mxu0 0.0
    %71 = vmatprep.subr.mxu0 0.0
    %72 = vmatpush2.msra.mxu0 0.0
    %73 = vmatprep.subr.mxu0 0.0
    %74 = vmatpush2.msra.mxu0 0.0
    %75 = vmatprep.subr.mxu0 0.0
    %76 = vmatpush2.msra.mxu0 0.0
    %77 = vmatprep.subr.mxu0 0.0
    %78 = vmatpush2.msra.mxu0 0.0
    %79 = vmatprep.subr.mxu0 0.0
    %80 = vmatpush2.msra.mxu0 0.0
    %81 = vmatprep.subr.mxu0 0.0
    %82 = vmatpush2.msra.mxu0 0.0
    %83 = vmatprep.subr.mxu0 0.0
    %84 = vmatpush2.msra.mxu0 0.0
    %85 = vmatprep.subr.mxu0 0.0
    %86 = vmatpush2.msra.mxu0 0.0
    %87 = vmatprep.subr.mxu0 0.0
    %88 = vmatpush2.msra.mxu0 0.0
    %89 = vmatprep.subr.mxu0 0.0
    %90 = vmatpush2.msra.mxu0 0.0
    %91 = vmatprep.subr.mxu0 0.0
    %92 = vmatpush2.msra.mxu0 0.0
    %93 = vmatprep.subr.mxu0 0.0
    %94 = vmatpush2.msra.mxu0 0.0
    %95 = vmatprep.mubr.f32.mxu0 0.0
    %96 = vmatmul.mubr.f32.gmra.mxu0 %v25
    %v97 = vpop.f32.mrf.mxu0
    %v98 = vadd.f32 0.0, %v97
    %v99 = vpop.f32.mrf.mxu0
    %100 = vdwg.mxu0
    %v101 = vmax.f32 %v98, 0.0
    %s102 = sld [smem:[#allocation2]]
    %vm103 = vcmask 261120
    %v105 = vsel %vm103, %v101, 0
    %107 = vmatprep.subr.mxu0 0.0
    %108 = vmatpush1.msra.mxu0 0.0
    %109 = vmatprep.subr.mxu0 0.0
    %110 = vmatpush1.msra.mxu0 0.0
    %111 = vmatprep.subr.mxu0 0.0
    %112 = vmatpush1.msra.mxu0 0.0
    %113 = vmatprep.subr.mxu0 0.0
    %114 = vmatpush1.msra.mxu0 0.0
    %115 = vmatprep.subr.mxu0 0.0
    %116 = vmatpush1.msra.mxu0 0.0
    %117 = vmatprep.subr.mxu0 0.0
    %118 = vmatpush1.msra.mxu0 0.0
    %119 = vmatprep.subr.mxu0 0.0
    %120 = vmatpush1.msra.mxu0 0.0
    %121 = vmatprep.subr.mxu0 0.0
    %122 = vmatpush1.msra.mxu0 0.0
    %123 = vmatprep.subr.mxu0 0.0
    %124 = vmatpush1.msra.mxu0 0.0
    %125 = vmatprep.subr.mxu0 0.0
    %126 = vmatpush1.msra.mxu0 0.0
    %127 = vmatprep.subr.mxu0 0.0
    %128 = vmatpush1.msra.mxu0 0.0
    %129 = vmatprep.subr.mxu0 0.0
    %130 = vmatpush1.msra.mxu0 0.0
    %131 = vmatprep.subr.mxu0 0.0
    %132 = vmatpush1.msra.mxu0 %v22
    %133 = vmatprep.subr.mxu0 0.0
    %134 = vmatpush1.msra.mxu0 %v21
    %135 = vmatprep.subr.mxu0 0.0
    %136 = vmatpush1.msra.mxu0 %v20
    %137 = vmatprep.subr.mxu0 0.0
    %138 = vmatpush1.msra.mxu0 %v19
    %139 = vmatprep.subr.mxu0 0.0
    %140 = vmatpush2.msra.mxu0 0.0
    %141 = vmatprep.subr.mxu0 0.0
    %142 = vmatpush2.msra.mxu0 0.0
    %143 = vmatprep.subr.mxu0 0.0
    %144 = vmatpush2.msra.mxu0 0.0
    %145 = vmatprep.subr.mxu0 0.0
    %146 = vmatpush2.msra.mxu0 0.0
    %147 = vmatprep.subr.mxu0 0.0
    %148 = vmatpush2.msra.mxu0 0.0
    %149 = vmatprep.subr.mxu0 0.0
    %150 = vmatpush2.msra.mxu0 0.0
    %151 = vmatprep.subr.mxu0 0.0
    %152 = vmatpush2.msra.mxu0 0.0
    %153 = vmatprep.subr.mxu0 0.0
    %154 = vmatpush2.msra.mxu0 0.0
    %155 = vmatprep.subr.mxu0 0.0
    %156 = vmatpush2.msra.mxu0 0.0
    %157 = vmatprep.subr.mxu0 0.0
    %158 = vmatpush2.msra.mxu0 0.0
    %159 = vmatprep.subr.mxu0 0.0
    %160 = vmatpush2.msra.mxu0 0.0
    %161 = vmatprep.subr.mxu0 0.0
    %162 = vmatpush2.msra.mxu0 0.0
    %163 = vmatprep.subr.mxu0 0.0
    %164 = vmatpush2.msra.mxu0 0.0
    %165 = vmatprep.subr.mxu0 0.0
    %166 = vmatpush2.msra.mxu0 0.0
    %167 = vmatprep.subr.mxu0 0.0
    %168 = vmatpush2.msra.mxu0 0.0
    %169 = vmatprep.subr.mxu0 0.0
    %170 = vmatpush2.msra.mxu0 0.0
    %171 = vmatprep.mubr.f32.mxu0 0.0
    %172 = vmatmul.mubr.f32.gmra.mxu0 %v105
    %v173 = vpop.f32.mrf.mxu0
    %v174 = vadd.f32 0.0, %v173
    %v175 = vpop.f32.mrf.mxu0
    %176 = vdwg.mxu0
    %v177 = vstv %s102
    %v178 = vmul.f32 %v177, %v174
    %180 = vrot.lane.b32.xlu0 %v178, 1
    %v181 = vpop.permute.xlu0 %180
    %v183 = vsub.f32 %v178, %v181
    %v184 = vmul.f32 %v183, 1.442695
    %v185 = vpow.pop %v184
    %v186 = vadd.f32 %v185, 1.0
    %v187 = vrcp.pop %v186
    %v188 = vmul.f32 1.0, %v187
    %v189 = vsub.f32 1.0, %v188
    %190 = vrot.lane.b32.xlu0 %v16, 119
    %v191 = vpop.permute.xlu0 %190
    %v193 = vsub.f32 %v188, %v191
    %194 = vrot.lane.b32.xlu0 %v16, 118
    %v195 = vpop.permute.xlu0 %194
    %v197 = vsub.f32 %v189, %v195
    %v198 = vmul.f32 %v193, %v193
    %v199 = vmul.f32 %v197, %v197
    %v200 = vadd.f32 %v198, %v199
    %v201 = vrsqrt.pop %v200
    %v202 = vmul.f32 %v200, %v201
    %vm203 = vcmp.eq.f32.partialorder %v200, inf
    %v204 = vsel %vm203, %v200, %v202
    %vm205 = vcmp.eq.f32.partialorder %v200, 0.0
    %v206 = vand.u32 %v200, 2147483648
    %v207 = vsel %vm205, %v206, %v204
    %209 = vrot.lane.b32.xlu0 %v207, 127
    %v210 = vpop.permute.xlu0 %209
    %vm212 = vcmask 1024
    %v213 = vsel %vm212, %v210, 0.0
    %214 = vadd.xlane.f32.xlu0 %v213
    %v215 = vpop.xlane.xlu0 %214
    %v216 = vrot.slane %v215, 4
    %v217 = vadd.f32 %v215, %v216
    %v218 = vrot.slane %v217, 2
    %v219 = vadd.f32 %v217, %v218
    %v220 = vrot.slane %v219, 1
    %v221 = vadd.f32 %v219, %v220
    %s222 = vtos %v221
    %s223 = smul.f32 %s222, 0.5
    %s224 = scalar_lea.smem [#allocation3], 0
    %225 = sst [smem:[%s224]] %s223
    // Predicated region
    $region14: #{tpu_custom_call.1} parent=1 // pred_check
      _
    $region15: #{tpu_custom_call.1} parent=1 // pred_check_branch
      %227 = sbr.rel (0) target = $region17
    $region16: #{tpu_custom_call.1} parent=1 // pred_region
      %s229 = ssub.s32 16, 16
      %230 = vsyncadd [#allocation4], %s229
      %233 = dma.smem_to_hbm [#allocation3], 16, %s3, [#allocation4]
    $region17: #{tpu_custom_call.1} parent=1 // pred_fallthru
      _
    // Predicated region
    $region18: #{tpu_custom_call.1} parent=1 // pred_check
      _
    $region19: #{tpu_custom_call.1} parent=1 // pred_check_branch
      %235 = sbr.rel (0) target = $region21
    $region20: #{tpu_custom_call.1} parent=1 // pred_region
      %236 = dma.done [#allocation4], 16
    $region21: #{tpu_custom_call.1} parent=1 // pred_fallthru
      _
    %237 = sfence
    %238 = vsyncpa [#allocation4], 1

</llo_original>
